<compile_context>
chip_gen: v7x
topology: tpu7x:2x2x1
jax: 0.10.0
libtpu: 0.0.40
codegen_flags: <defaults>
</compile_context>

<pallas_src>
import functools

import jax
import jax.numpy as jnp
import numpy as np
from jax.experimental import pallas as pl
from jax.experimental.pallas import tpu as pltpu

_MIB = 1024 * 1024


def _focal_kernel(*refs, gamma, alpha, has_mask, group, r_total, tile_r,
                  needs_row_mask):
    """Grid = (B, n_row_tiles).  Ref layout (batch block dim squeezed):

      logits_ref, targets_ref   : (tile_r, L)      input blocks, native dtype
      [mask_ref]                : (tile_r, group)  only when has_mask
      [expand_ref]              : (group, L)       only when has_mask, group>1
      loss_out_ref, pos_out_ref : (1, 1, 1)        per-batch f32 sums
      loss_acc_ref, pos_acc_ref : (1, L)           f32 VMEM lane accumulators
    """
    it = iter(refs)
    logits_ref = next(it)
    targets_ref = next(it)
    mask_ref = next(it) if has_mask else None
    expand_ref = next(it) if (has_mask and group > 1) else None
    loss_out_ref = next(it)
    pos_out_ref = next(it)
    loss_acc_ref = next(it)
    pos_acc_ref = next(it)

    n = pl.program_id(1)
    n_last = pl.num_programs(1) - 1

    @pl.when(n == 0)
    def _():
        loss_acc_ref[...] = jnp.zeros_like(loss_acc_ref)
        pos_acc_ref[...] = jnp.zeros_like(pos_acc_ref)

    x = logits_ref[...].astype(jnp.float32)    # (tile_r, L)
    t = targets_ref[...].astype(jnp.float32)   # (tile_r, L)

    # Sigmoid via one EUP tanh and the stable BCE log-term via one EUP log
    # (2 transcendentals / element, no approx reciprocal):
    #   p             = sigmoid(x) = 0.5 + 0.5*tanh(x/2)
    #   log1p(e^-|x|) = -log(sigmoid(|x|)) = -log(where(x >= 0, p, 1 - p))
    #   ce            = max(x, 0) - x*t + log1p(e^-|x|)
    p = 0.5 + 0.5 * jnp.tanh(0.5 * x)
    sig_abs = jnp.where(x >= 0.0, p, 1.0 - p)
    ce = jnp.maximum(x, 0.0) - x * t - jnp.log(sig_abs)

    # 1 - p_t = 1 - (p*t + (1-p)*(1-t)) = p + t - 2*p*t
    y = p + t - 2.0 * (p * t)

    g = float(gamma)
    if g == 0.0:
        mod = jnp.ones_like(y)
    elif g == round(g) and 0 < int(round(g)) <= 4:
        mod = y
        for _ in range(int(round(g)) - 1):
            mod = mod * y
    else:
        mod = jnp.power(y, g)
    loss = ce * mod

    if has_mask:
        m = mask_ref[...].astype(jnp.float32)          # (tile_r, group)
        if group > 1:
            # Expand the per-anchor mask over the class lanes with the idle
            # MXU: (tile_r, group) @ (group, L), E[j, l] = (l // C == j).
            m = jnp.dot(m, expand_ref[...], preferred_element_type=jnp.float32)
        loss = loss * m                                # broadcasts if group==1

    if alpha >= 0:
        # alpha_t = alpha*t + (1-alpha)*(1-t) = (2*alpha - 1)*t + (1 - alpha)
        loss = ((2.0 * alpha - 1.0) * t + (1.0 - alpha)) * loss

    pos = (t == 1.0).astype(jnp.float32)

    def _accumulate(l, q):
        # Sublane-only reduce per step; cross-lane reduce once per batch below.
        loss_acc_ref[...] += jnp.sum(l, axis=0, keepdims=True)
        pos_acc_ref[...] += jnp.sum(q, axis=0, keepdims=True)

    if needs_row_mask:
        # Only the last tile can run past r_total; full tiles skip the select.
        @pl.when(n == n_last)
        def _():
            row = jax.lax.broadcasted_iota(jnp.int32, loss.shape, 0) + n * tile_r
            valid = row < r_total
            _accumulate(jnp.where(valid, loss, 0.0), jnp.where(valid, pos, 0.0))

        @pl.when(n != n_last)
        def _():
            _accumulate(loss, pos)
    else:
        _accumulate(loss, pos)

    @pl.when(n == n_last)
    def _():
        loss_out_ref[...] = jnp.sum(loss_acc_ref[...]).reshape(1, 1, 1)
        pos_out_ref[...] = jnp.sum(pos_acc_ref[...]).reshape(1, 1, 1)


def _vmem_limit_bytes():
    """Generation-aware scoped VMEM limit (v5e/v6e: 128 MiB phys, v7x: 64)."""
    try:
        phys = int(pltpu.get_tpu_info().vmem_capacity_bytes)
    except Exception:
        phys = 64 * _MIB                        # conservative (v7x-sized)
    if phys >= 100 * _MIB:
        return 96 * _MIB                        # v5e / v6e
    return 48 * _MIB                            # v7x


def _block_budget_bytes(vmem_limit, itemsize):
    # 2 inputs x 2 pipeline buffers of native-dtype blocks, plus ~8 live f32
    # temporaries of the same element count inside the body; stay under ~80%
    # of the scoped limit.
    per_block_units = 4.0 + 8.0 * (4.0 / itemsize)
    return int(0.8 * vmem_limit / per_block_units)


def _pick_tile_r(r_total, lanes, itemsize, budget_bytes, align):
    """Largest `align`-multiple row count whose block fits the byte budget,
    preferring a divisor of r_total (no ragged last tile)."""
    rows = budget_bytes // max(1, lanes * itemsize)
    rows = max(align, (rows // align) * align)
    if rows >= r_total:
        return r_total
    for cand in range(rows, align - 1, -align):
        if r_total % cand == 0:
            if 2 * cand >= rows:     # only if it does not shrink the tile >2x
                return cand
            break
    return rows


def focal_with_logits_loss(logits, targets, mask=None, *, reduction='mean',
                           gamma=2.0, alpha=0.25, tile_r=None):
    B, N, C = logits.shape
    has_mask = mask is not None
    itemsize = jnp.dtype(logits.dtype).itemsize
    align = max(8, 32 // itemsize)    # sublane packing: f32 -> 8, bf16 -> 16

    # Lane-dense effective layout [B, R, L]:
    #  * C % 128 == 0 -> already lane dense.
    #  * 128 % C == 0 -> fold group = 128 // C anchors into each 128-lane row.
    #  * otherwise    -> fall back to [B, N, C] (lane-sparse).
    if C % 128 == 0:
        group, R, L = 1, N, C
    elif 128 % C == 0 and N % (128 // C) == 0:
        group = 128 // C
        R, L = N // group, 128
    else:
        group, R, L = 1, N, C

    x = logits if (R, L) == (N, C) else logits.reshape(B, R, L)
    t = targets if (R, L) == (N, C) else targets.reshape(B, R, L)

    vmem_limit = _vmem_limit_bytes()
    if tile_r is None:
        tile_r = _pick_tile_r(R, L, itemsize,
                              _block_budget_bytes(vmem_limit, itemsize), align)
    tile_r = min(int(tile_r), R)
    if tile_r < R:
        tile_r = max(align, (tile_r // align) * align)
    n_tiles = pl.cdiv(R, tile_r)
    needs_row_mask = (R % tile_r) != 0

    in_specs = [
        pl.BlockSpec((None, tile_r, L), lambda b, n: (b, n, 0)),
        pl.BlockSpec((None, tile_r, L), lambda b, n: (b, n, 0)),
    ]
    args = [x, t]                # native dtype; cast to f32 inside the kernel
    if has_mask:
        in_specs.append(
            pl.BlockSpec((None, tile_r, group), lambda b, n: (b, n, 0)))
        args.append(mask.reshape(B, R, group))
        if group > 1:
            # Constant 0/1 expansion matrix, E[j, l] = (l // C == j).
            expand = jnp.asarray(
                np.repeat(np.eye(group, dtype=np.float32), C, axis=1))
            in_specs.append(pl.BlockSpec((group, L), lambda b, n: (0, 0)))
            args.append(expand)

    kernel = functools.partial(
        _focal_kernel, gamma=float(gamma), alpha=float(alpha),
        has_mask=has_mask, group=group, r_total=R, tile_r=tile_r,
        needs_row_mask=needs_row_mask)

    mask_bytes = (B * N * jnp.dtype(mask.dtype).itemsize) if has_mask else 0
    cost = pl.CostEstimate(
        flops=16 * B * N * C,
        transcendentals=2 * B * N * C,
        bytes_accessed=2 * B * N * C * itemsize + mask_bytes + 2 * B * 4)

    loss_sums, pos_sums = pl.pallas_call(
        kernel,
        out_shape=(jax.ShapeDtypeStruct((B, 1, 1), jnp.float32),
                   jax.ShapeDtypeStruct((B, 1, 1), jnp.float32)),
        grid=(B, n_tiles),
        in_specs=in_specs,
        out_specs=(
            pl.BlockSpec((1, 1, 1), lambda b, n: (b, 0, 0)),
            pl.BlockSpec((1, 1, 1), lambda b, n: (b, 0, 0)),
        ),
        scratch_shapes=[pltpu.VMEM((1, L), jnp.float32),
                        pltpu.VMEM((1, L), jnp.float32)],
        compiler_params=pltpu.CompilerParams(
            dimension_semantics=("parallel", "arbitrary"),
            vmem_limit_bytes=vmem_limit),
        cost_estimate=cost,
    )(*args)

    loss_sums = loss_sums.reshape(B)
    pos_sums = pos_sums.reshape(B)

    if reduction == 'mean':
        num_pos = jnp.maximum(pos_sums, 1.0)        # torch .clamp(1.0)
        return jnp.sum(loss_sums / num_pos)
    elif reduction == 'sum':
        return jnp.sum(loss_sums)
    else:
        raise NotImplementedError("reduction='none' not implemented")


def _reference(logits, targets, mask=None, reduction='mean', gamma=2.0,
               alpha=0.25):
    x = logits.astype(jnp.float32)
    t = targets.astype(jnp.float32)
    p = jax.nn.sigmoid(x)
    ce = jnp.maximum(x, 0.0) - x * t + jnp.log1p(jnp.exp(-jnp.abs(x)))
    p_t = p * t + (1.0 - p) * (1.0 - t)
    loss = ce * (1.0 - p_t) ** gamma
    if mask is not None:
        loss = loss * mask.astype(jnp.float32)[..., None]
    if alpha >= 0:
        alpha_t = alpha * t + (1.0 - alpha) * (1.0 - t)
        loss = alpha_t * loss
    if reduction == 'mean':
        pos = (t == 1.0).astype(jnp.float32)
        num_pos = jnp.maximum(pos.sum(axis=(1, 2)), 1.0)
        return jnp.sum(loss.sum(axis=(1, 2)) / num_pos)
    return jnp.sum(loss)


if __name__ == "__main__":
    key = jax.random.PRNGKey(0)
    k1, k2, k3, k4, k5, k6 = jax.random.split(key, 6)

    # tanh-based sigmoid and exact log: no approx-reciprocal error, so a tight
    # tolerance is fine.
    RTOL = 1e-3
    ATOL = 1e-3

    # Case 1: mean reduction with mask, f32, C=32 -> lane-dense grouped layout
    # (group=4) exercising the constant-matmul mask expansion.
    B, N, C = 2, 8, 32
    logits = jax.random.normal(k1, (B, N, C), dtype=jnp.float32) * 2.0
    targets = jax.random.bernoulli(k2, 0.3, (B, N, C)).astype(jnp.float32)
    mask = jax.random.bernoulli(k3, 0.8, (B, N)).astype(jnp.float32)

    out_mean = focal_with_logits_loss(logits, targets, mask, reduction='mean')
    out_mean = jax.block_until_ready(out_mean)
    ref_mean = _reference(logits, targets, mask, reduction='mean')
    assert jnp.allclose(out_mean, ref_mean, rtol=RTOL, atol=ATOL), \
        (out_mean, ref_mean)

    # Case 2: sum reduction without mask (mask-free kernel variant), bf16
    # inputs fed natively, lane-dense grouped layout.
    logits_bf16 = logits.astype(jnp.bfloat16)
    targets_bf16 = targets.astype(jnp.bfloat16)
    out_sum = focal_with_logits_loss(logits_bf16, targets_bf16, None,
                                     reduction='sum')
    out_sum = jax.block_until_ready(out_sum)
    ref_sum = _reference(logits_bf16, targets_bf16, None, reduction='sum')
    assert jnp.allclose(out_sum, ref_sum, rtol=RTOL, atol=ATOL), \
        (out_sum, ref_sum)

    # Case 3: C=128 (already lane dense), forced small row tile with a ragged
    # last tile (R=20, tile_r=8 -> 3 tiles) to exercise the pl.when-gated
    # row-mask path and the resident accumulator across tiles.
    B2, N2, C2 = 2, 20, 128
    logits2 = jax.random.normal(k4, (B2, N2, C2), dtype=jnp.float32) * 2.0
    targets2 = jax.random.bernoulli(k5, 0.3, (B2, N2, C2)).astype(jnp.float32)
    mask2 = jax.random.bernoulli(k6, 0.8, (B2, N2)).astype(jnp.float32)

    out_tiled = focal_with_logits_loss(logits2, targets2, mask2,
                                       reduction='mean', tile_r=8)
    out_tiled = jax.block_until_ready(out_tiled)
    ref_tiled = _reference(logits2, targets2, mask2, reduction='mean')
    assert jnp.allclose(out_tiled, ref_tiled, rtol=RTOL, atol=ATOL), \
        (out_tiled, ref_tiled)

    print("KERNEL_OK")
</pallas_src>

<mosaic_0001>
module attributes {stable_mosaic.version = 11 : i64} {
  func.func @_focal_kernel(%arg0: i32, %arg1: i32, %arg2: memref<1x2x128xf32, #tpu.memory_space<vmem>>, %arg3: memref<1x2x128xf32, #tpu.memory_space<vmem>>, %arg4: memref<1x2x4xf32, #tpu.memory_space<vmem>>, %arg5: memref<4x128xf32, #tpu.memory_space<vmem>>, %arg6: memref<1x1x1xf32, #tpu.memory_space<vmem>>, %arg7: memref<1x1x1xf32, #tpu.memory_space<vmem>>, %arg8: memref<1x128xf32, #tpu.memory_space<vmem>>, %arg9: memref<1x128xf32, #tpu.memory_space<vmem>>) attributes {dimension_semantics = [#tpu.dimension_semantics<parallel>, #tpu.dimension_semantics<arbitrary>], iteration_bounds = array<i64: 2, 1>, scalar_prefetch = 0 : i64, scratch_operands = 2 : i64, tpu.core_type = #tpu.core_type<tc>, window_params = [{transform_indices = @transform_0, window_bounds = array<i64: 1, 2, 128>}, {transform_indices = @transform_1, window_bounds = array<i64: 1, 2, 128>}, {transform_indices = @transform_2, window_bounds = array<i64: 1, 2, 4>}, {pipeline_mode = #tpu.pipeline_mode<synchronous>, transform_indices = @transform_3, window_bounds = array<i64: 4, 128>}, {transform_indices = @transform_4, window_bounds = array<i64: 1, 1, 1>}, {transform_indices = @transform_5, window_bounds = array<i64: 1, 1, 1>}]} {
    %c0_i32 = arith.constant 0 : i32
    %0 = arith.cmpi eq, %arg1, %c0_i32 : i32
    %1 = arith.extui %0 : i1 to i32
    %c0_i32_0 = arith.constant 0 : i32
    %2 = arith.cmpi ne, %1, %c0_i32_0 : i32
    scf.if %2 {
      %cst_33 = arith.constant 0.000000e+00 : f32
      %59 = vector.broadcast %cst_33 : f32 to vector<1x128xf32>
      %c0_34 = arith.constant 0 : index
      %c0_35 = arith.constant 0 : index
      %60 = vector.load %arg8[%c0_34, %c0_35] : memref<1x128xf32, #tpu.memory_space<vmem>>, vector<1x128xf32>
      tpu.vector_store %arg8[%c0_34, %c0_35], %59 {strides = array<i32>} : memref<1x128xf32, #tpu.memory_space<vmem>>, vector<1x128xf32>,
      %cst_36 = arith.constant 0.000000e+00 : f32
      %61 = vector.broadcast %cst_36 : f32 to vector<1x128xf32>
      %c0_37 = arith.constant 0 : index
      %c0_38 = arith.constant 0 : index
      %62 = vector.load %arg9[%c0_37, %c0_38] : memref<1x128xf32, #tpu.memory_space<vmem>>, vector<1x128xf32>
      tpu.vector_store %arg9[%c0_37, %c0_38], %61 {strides = array<i32>} : memref<1x128xf32, #tpu.memory_space<vmem>>, vector<1x128xf32>,
    } else {
    }
    %c0 = arith.constant 0 : index
    %c0_1 = arith.constant 0 : index
    %c0_2 = arith.constant 0 : index
    %3 = vector.load %arg2[%c0, %c0_1, %c0_2] : memref<1x2x128xf32, #tpu.memory_space<vmem>>, vector<1x2x128xf32>
    %4 = vector.shape_cast %3 : vector<1x2x128xf32> to vector<2x128xf32>
    %c0_3 = arith.constant 0 : index
    %c0_4 = arith.constant 0 : index
    %c0_5 = arith.constant 0 : index
    %5 = vector.load %arg3[%c0_3, %c0_4, %c0_5] : memref<1x2x128xf32, #tpu.memory_space<vmem>>, vector<1x2x128xf32>
    %6 = vector.shape_cast %5 : vector<1x2x128xf32> to vector<2x128xf32>
    %cst = arith.constant 5.000000e-01 : f32
    %7 = vector.broadcast %cst : f32 to vector<2x128xf32>
    %8 = arith.mulf %7, %4 : vector<2x128xf32>
    %9 = math.tanh %8 : vector<2x128xf32>
    %cst_6 = arith.constant 5.000000e-01 : f32
    %10 = vector.broadcast %cst_6 : f32 to vector<2x128xf32>
    %11 = arith.mulf %10, %9 : vector<2x128xf32>
    %cst_7 = arith.constant 5.000000e-01 : f32
    %12 = vector.broadcast %cst_7 : f32 to vector<2x128xf32>
    %13 = arith.addf %12, %11 : vector<2x128xf32>
    %cst_8 = arith.constant 0.000000e+00 : f32
    %14 = vector.broadcast %cst_8 : f32 to vector<2x128xf32>
    %15 = arith.cmpf oge, %4, %14 : vector<2x128xf32>
    %cst_9 = arith.constant 1.000000e+00 : f32
    %16 = vector.broadcast %cst_9 : f32 to vector<2x128xf32>
    %17 = arith.subf %16, %13 : vector<2x128xf32>
    %18 = arith.select %15, %13, %17 : vector<2x128xi1>, vector<2x128xf32>
    %cst_10 = arith.constant 0.000000e+00 : f32
    %19 = vector.broadcast %cst_10 : f32 to vector<2x128xf32>
    %20 = arith.maximumf %4, %19 : vector<2x128xf32>
    %21 = arith.mulf %4, %6 : vector<2x128xf32>
    %22 = arith.subf %20, %21 : vector<2x128xf32>
    %23 = math.log %18 : vector<2x128xf32>
    %24 = arith.subf %22, %23 : vector<2x128xf32>
    %25 = arith.addf %13, %6 : vector<2x128xf32>
    %26 = arith.mulf %13, %6 : vector<2x128xf32>
    %cst_11 = arith.constant 2.000000e+00 : f32
    %27 = vector.broadcast %cst_11 : f32 to vector<2x128xf32>
    %28 = arith.mulf %27, %26 : vector<2x128xf32>
    %29 = arith.subf %25, %28 : vector<2x128xf32>
    %30 = arith.mulf %29, %29 : vector<2x128xf32>
    %31 = arith.mulf %24, %30 : vector<2x128xf32>
    %c0_12 = arith.constant 0 : index
    %c0_13 = arith.constant 0 : index
    %c0_14 = arith.constant 0 : index
    %32 = vector.load %arg4[%c0_12, %c0_13, %c0_14] : memref<1x2x4xf32, #tpu.memory_space<vmem>>, vector<1x2x4xf32>
    %33 = vector.shape_cast %32 : vector<1x2x4xf32> to vector<2x4xf32>
    %c0_15 = arith.constant 0 : index
    %c0_16 = arith.constant 0 : index
    %34 = vector.load %arg5[%c0_15, %c0_16] : memref<4x128xf32, #tpu.memory_space<vmem>>, vector<4x128xf32>
    %cst_17 = arith.constant dense<0.000000e+00> : vector<2x128xf32>
    %35 = tpu.matmul %33, %34, %cst_17 {dimension_numbers = #tpu.dot_dimension_numbers<[1], [0], [0], [1], [0, 0, 1, 1], [], []>} : vector<2x4xf32>, vector<4x128xf32>, vector<2x128xf32> -> vector<2x128xf32>
    %36 = arith.mulf %31, %35 : vector<2x128xf32>
    %cst_18 = arith.constant -5.000000e-01 : f32
    %37 = vector.broadcast %cst_18 : f32 to vector<2x128xf32>
    %38 = arith.mulf %37, %6 : vector<2x128xf32>
    %cst_19 = arith.constant 7.500000e-01 : f32
    %39 = vector.broadcast %cst_19 : f32 to vector<2x128xf32>
    %40 = arith.addf %38, %39 : vector<2x128xf32>
    %41 = arith.mulf %40, %36 : vector<2x128xf32>
    %cst_20 = arith.constant 1.000000e+00 : f32
    %42 = vector.broadcast %cst_20 : f32 to vector<2x128xf32>
    %43 = arith.cmpf oeq, %6, %42 : vector<2x128xf32>
    %44 = arith.extui %43 : vector<2x128xi1> to vector<2x128xi32>
    %45 = arith.sitofp %44 : vector<2x128xi32> to vector<2x128xf32>
    %c0_21 = arith.constant 0 : index
    %c0_22 = arith.constant 0 : index
    %46 = vector.load %arg8[%c0_21, %c0_22] : memref<1x128xf32, #tpu.memory_space<vmem>>, vector<1x128xf32>
    %cst_23 = arith.constant dense<0.000000e+00> : vector<128xf32>
    %47 = vector.multi_reduction <add>, %41, %cst_23 [0] : vector<2x128xf32> to vector<128xf32>
    %48 = vector.shape_cast %47 : vector<128xf32> to vector<1x128xf32>
    %49 = arith.addf %46, %48 : vector<1x128xf32>
    %c0_24 = arith.constant 0 : index
    %c0_25 = arith.constant 0 : index
    %50 = vector.load %arg8[%c0_24, %c0_25] : memref<1x128xf32, #tpu.memory_space<vmem>>, vector<1x128xf32>
    tpu.vector_store %arg8[%c0_24, %c0_25], %49 {strides = array<i32>} : memref<1x128xf32, #tpu.memory_space<vmem>>, vector<1x128xf32>,
    %c0_26 = arith.constant 0 : index
    %c0_27 = arith.constant 0 : index
    %51 = vector.load %arg9[%c0_26, %c0_27] : memref<1x128xf32, #tpu.memory_space<vmem>>, vector<1x128xf32>
    %cst_28 = arith.constant dense<0.000000e+00> : vector<128xf32>
    %52 = vector.multi_reduction <add>, %45, %cst_28 [0] : vector<2x128xf32> to vector<128xf32>
    %53 = vector.shape_cast %52 : vector<128xf32> to vector<1x128xf32>
    %54 = arith.addf %51, %53 : vector<1x128xf32>
    %c0_29 = arith.constant 0 : index
    %c0_30 = arith.constant 0 : index
    %55 = vector.load %arg9[%c0_29, %c0_30] : memref<1x128xf32, #tpu.memory_space<vmem>>, vector<1x128xf32>
    tpu.vector_store %arg9[%c0_29, %c0_30], %54 {strides = array<i32>} : memref<1x128xf32, #tpu.memory_space<vmem>>, vector<1x128xf32>,
    %c0_i32_31 = arith.constant 0 : i32
    %56 = arith.cmpi eq, %arg1, %c0_i32_31 : i32
    %57 = arith.extui %56 : i1 to i32
    %c0_i32_32 = arith.constant 0 : i32
    %58 = arith.cmpi ne, %57, %c0_i32_32 : i32
    scf.if %58 {
      %c0_33 = arith.constant 0 : index
      %c0_34 = arith.constant 0 : index
      %59 = vector.load %arg8[%c0_33, %c0_34] : memref<1x128xf32, #tpu.memory_space<vmem>>, vector<1x128xf32>
      %60 = vector.shape_cast %59 : vector<1x128xf32> to vector<1x1x128xf32>
      %cst_35 = arith.constant dense<0.000000e+00> : vector<1xf32>
      %61 = vector.multi_reduction <add>, %60, %cst_35 [1, 2] : vector<1x1x128xf32> to vector<1xf32>
      %62 = vector.shape_cast %61 : vector<1xf32> to vector<1x1x1xf32>
      %63 = vector.extract %62[0, 0, 0] : f32 from vector<1x1x1xf32>
      %64 = vector.broadcast %63 : f32 to vector<1x1x1xf32>
      %c0_36 = arith.constant 0 : index
      %c0_37 = arith.constant 0 : index
      %c0_38 = arith.constant 0 : index
      %65 = vector.load %arg6[%c0_36, %c0_37, %c0_38] : memref<1x1x1xf32, #tpu.memory_space<vmem>>, vector<1x1x1xf32>
      tpu.vector_store %arg6[%c0_36, %c0_37, %c0_38], %64 {strides = array<i32>} : memref<1x1x1xf32, #tpu.memory_space<vmem>>, vector<1x1x1xf32>,
      %c0_39 = arith.constant 0 : index
      %c0_40 = arith.constant 0 : index
      %66 = vector.load %arg9[%c0_39, %c0_40] : memref<1x128xf32, #tpu.memory_space<vmem>>, vector<1x128xf32>
      %67 = vector.shape_cast %66 : vector<1x128xf32> to vector<1x1x128xf32>
      %cst_41 = arith.constant dense<0.000000e+00> : vector<1xf32>
      %68 = vector.multi_reduction <add>, %67, %cst_41 [1, 2] : vector<1x1x128xf32> to vector<1xf32>
      %69 = vector.shape_cast %68 : vector<1xf32> to vector<1x1x1xf32>
      %70 = vector.extract %69[0, 0, 0] : f32 from vector<1x1x1xf32>
      %71 = vector.broadcast %70 : f32 to vector<1x1x1xf32>
      %c0_42 = arith.constant 0 : index
      %c0_43 = arith.constant 0 : index
      %c0_44 = arith.constant 0 : index
      %72 = vector.load %arg7[%c0_42, %c0_43, %c0_44] : memref<1x1x1xf32, #tpu.memory_space<vmem>>, vector<1x1x1xf32>
      tpu.vector_store %arg7[%c0_42, %c0_43, %c0_44], %71 {strides = array<i32>} : memref<1x1x1xf32, #tpu.memory_space<vmem>>, vector<1x1x1xf32>,
    } else {
    }
    return
  }
  func.func @transform_0(%arg0: i32, %arg1: i32) -> (i32, i32, i32) {
    %c0_i32 = arith.constant 0 : i32
    %c0_i32_0 = arith.constant 0 : i32
    return %arg0, %arg1, %c0_i32 : i32, i32, i32
  }
  func.func @transform_1(%arg0: i32, %arg1: i32) -> (i32, i32, i32) {
    %c0_i32 = arith.constant 0 : i32
    %c0_i32_0 = arith.constant 0 : i32
    return %arg0, %arg1, %c0_i32 : i32, i32, i32
  }
  func.func @transform_2(%arg0: i32, %arg1: i32) -> (i32, i32, i32) {
    %c0_i32 = arith.constant 0 : i32
    %c0_i32_0 = arith.constant 0 : i32
    return %arg0, %arg1, %c0_i32 : i32, i32, i32
  }
  func.func @transform_3(%arg0: i32, %arg1: i32) -> (i32, i32) {
    %c0_i32 = arith.constant 0 : i32
    %c0_i32_0 = arith.constant 0 : i32
    %c0_i32_1 = arith.constant 0 : i32
    return %c0_i32, %c0_i32_0 : i32, i32
  }
  func.func @transform_4(%arg0: i32, %arg1: i32) -> (i32, i32, i32) {
    %c0_i32 = arith.constant 0 : i32
    %c0_i32_0 = arith.constant 0 : i32
    %c0_i32_1 = arith.constant 0 : i32
    return %arg0, %c0_i32, %c0_i32_0 : i32, i32, i32
  }
  func.func @transform_5(%arg0: i32, %arg1: i32) -> (i32, i32, i32) {
    %c0_i32 = arith.constant 0 : i32
    %c0_i32_0 = arith.constant 0 : i32
    %c0_i32_1 = arith.constant 0 : i32
    return %arg0, %c0_i32, %c0_i32_0 : i32, i32, i32
  }
}

</mosaic_0001>

<llo_original>
// kernel: tpu_custom_call.1
$region0: #{tpu_custom_call.1}
  #allocation0 [shape = 'u32[]', space=smem, size = 0x4, offset = 0x4, fixed_abs, tag = 'smem constant byte address 0x4 - core index']
  #allocation1 [shape = 'u32[144,128]{1,0:T(1,128)}', space=vmem, size = 0x12000, scoped, tag = 'internal scratch']
  #allocation2 [shape = 'f32[1,128]{1,0:T(1,128)}', space=vmem, size = 0x200, scoped, tag = 'scratch operand']
  #allocation3 [shape = 'f32[1,128]{1,0:T(1,128)}', space=vmem, size = 0x200, scoped, tag = 'scratch operand']
  %s0 = inlined_call_operand.hbm [shape: f32[2,2,128], index: 0, kind: input, shape index: {}]
  %s1 = inlined_call_operand.hbm [shape: f32[2,2,128], index: 1, kind: input, shape index: {}]
  %s2 = inlined_call_operand.vmem [shape: f32[2,2,4], index: 2, kind: input, shape index: {}]
  %s3 = inlined_call_operand.vmem [shape: f32[4,128], index: 3, kind: input, shape index: {}]
  %s4 = inlined_call_operand.vmem [shape: f32[2,1,1], index: 4, kind: output, shape index: {0}]
  %s5 = inlined_call_operand.vmem [shape: f32[2,1,1], index: 5, kind: output, shape index: {1}]
  %6 = xla_tuple %s4, %s5
  %s7 = sld [smem:[#allocation0]]
  $region73: #{tpu_custom_call.1} parent=0
    _
  %s9 = ssub.s32 1, %s7
  %s10 = scalar_select 0, %s9, %s7
  $region1: #{tpu_custom_call.1} parent=0
    #allocation4 [shape = 'u8[2048]{0}', space=vmem, size = 0x800, scoped, tag = 'input window, operand 0']
    #allocation5 [shape = 's32[2]{0}', space=sflag, size = 0x8, scoped, tag = 'scoped memory for tpu_custom_call.1']
    #allocation6 [shape = 'u8[2048]{0}', space=vmem, size = 0x800, scoped, tag = 'input window, operand 1']
    #allocation7 [shape = 's32[2]{0}', space=sflag, size = 0x8, scoped, tag = 'scoped memory for tpu_custom_call.1']
    %11 = vsyncpa [#allocation5], 0
    %s12 = scalar_lea.sflag [#allocation5], 1
    %13 = vsyncpa %s12, 0
    %14 = vsyncpa [#allocation7], 0
    %s15 = scalar_lea.sflag [#allocation7], 1
    %16 = vsyncpa %s15, 0
    loop: start=0, step=1, limit=4
    $region2: #{tpu_custom_call.1} parent=1 // loop_pre_header
      _
    $region3: #{tpu_custom_call.1} parent=1 // loop_header
      %s18 = sphi 0, %s22
      %p19 = scmp.ge.s32.totalorder %s18, 4
      %s25 = sphi 0, %s37
      %s26 = sphi 0, %s33
      %s27 = sphi 0, %s25
      %s28 = sphi 0, %s26
      %s29 = sphi 0, %s27
      %s30 = sphi 0, %s28
      %s42 = sphi 0, %s44
      %s45 = sphi 0, %s42
      %s46 = sphi 0, %s45
      %s62 = sphi 0, %s46
      %s70 = sphi 0, %s72
      %s73 = sphi 0, %s70
      %s74 = sphi 0, %s73
      %s90 = sphi 0, %s74
      %s98 = sphi 0, %s100
      %s101 = sphi 0, %s98
      %s102 = sphi 0, %s101
      %s118 = sphi 0, %s102
      %s122 = sphi 0, %s122
      %s124 = sphi 0, %s122
      %s125 = sphi 0, %s124
      %s139 = sphi 0, %s125
      %s145 = sphi 0, %s147
      %s148 = sphi 0, %s145
      %s149 = sphi 0, %s148
      %s165 = sphi 0, %s149
      %s171 = sphi 0, %s173
      %s174 = sphi 0, %s171
      %s175 = sphi 0, %s174
      %s191 = sphi 0, %s175
    $region4: #{tpu_custom_call.1} parent=1 // loop_header_branch
      %21 = sbr.rel (%p19) target = $region8
    $region5: #{tpu_custom_call.1} parent=1 // loop_body
      %s23 = ssub.s32 %s18, 1
      %s24 = ssub.s32 %s18, 2
      %s31 = sadd.s32 1, %s26
      %p32 = scmp.ge.s32.totalorder %s31, 1
      %s33 = scalar_select %p32, 0, %s31
      %s34 = sadd.s32 1, %s25
      %s35 = scalar_select %p32, %s34, %s25
      %p36 = scmp.ge.s32.totalorder %s35, 2
      %s37 = scalar_select %p36, 0, %s35
      %s38 = ssub.s32 %s25, %s37
      %s39 = ssub.s32 %s26, %s33
      %s40 = sor.u32 %s38, %s39
      %p41 = scmp.eq.s32.totalorder %s40, 0
      %s43 = sadd.s32 %s42, 1
      %s44 = scalar_select %p41, %s42, %s43
      %p47 = pneg %p41
      %p48 = scmp.eq.s32.totalorder %s18, 1
      %p49 = por %p47, %p48
      %p50 = scmp.ne.s32.totalorder %s42, %s45
      %p51 = scmp.eq.s32.totalorder %s18, 0
      %p52 = por %p50, %p51
      %p53 = scmp.ne.s32.totalorder %s42, %s45
      %p54 = scmp.eq.s32.totalorder %s23, 1
      %p55 = por %p53, %p54
      %p56 = scmp.ne.s32.totalorder %s45, %s46
      %p57 = scmp.eq.s32.totalorder %s23, 0
      %p58 = por %p56, %p57
      %p59 = scmp.ne.s32.totalorder %s45, %s46
      %p60 = scmp.eq.s32.totalorder %s24, 1
      %p61 = por %p59, %p60
      %p63 = scmp.ne.s32.totalorder %s46, %s62
      %p64 = scmp.eq.s32.totalorder %s24, 0
      %p65 = por %p63, %p64
      %s66 = ssub.s32 %s25, %s37
      %s67 = ssub.s32 %s26, %s33
      %s68 = sor.u32 %s66, %s67
      %p69 = scmp.eq.s32.totalorder %s68, 0
      %s71 = sadd.s32 %s70, 1
      %s72 = scalar_select %p69, %s70, %s71
      %p75 = pneg %p69
      %p76 = scmp.eq.s32.totalorder %s18, 1
      %p77 = por %p75, %p76
      %p78 = scmp.ne.s32.totalorder %s70, %s73
      %p79 = scmp.eq.s32.totalorder %s18, 0
      %p80 = por %p78, %p79
      %p81 = scmp.ne.s32.totalorder %s70, %s73
      %p82 = scmp.eq.s32.totalorder %s23, 1
      %p83 = por %p81, %p82
      %p84 = scmp.ne.s32.totalorder %s73, %s74
      %p85 = scmp.eq.s32.totalorder %s23, 0
      %p86 = por %p84, %p85
      %p87 = scmp.ne.s32.totalorder %s73, %s74
      %p88 = scmp.eq.s32.totalorder %s24, 1
      %p89 = por %p87, %p88
      %p91 = scmp.ne.s32.totalorder %s74, %s90
      %p92 = scmp.eq.s32.totalorder %s24, 0
      %p93 = por %p91, %p92
      %s94 = ssub.s32 %s25, %s37
      %s95 = ssub.s32 %s26, %s33
      %s96 = sor.u32 %s94, %s95
      %p97 = scmp.eq.s32.totalorder %s96, 0
      %s99 = sadd.s32 %s98, 1
      %s100 = scalar_select %p97, %s98, %s99
      %p103 = pneg %p97
      %p104 = scmp.eq.s32.totalorder %s18, 1
      %p105 = por %p103, %p104
      %p106 = scmp.ne.s32.totalorder %s98, %s101
      %p107 = scmp.eq.s32.totalorder %s18, 0
      %p108 = por %p106, %p107
      %p109 = scmp.ne.s32.totalorder %s98, %s101
      %p110 = scmp.eq.s32.totalorder %s23, 1
      %p111 = por %p109, %p110
      %p112 = scmp.ne.s32.totalorder %s101, %s102
      %p113 = scmp.eq.s32.totalorder %s23, 0
      %p114 = por %p112, %p113
      %p115 = scmp.ne.s32.totalorder %s101, %s102
      %p116 = scmp.eq.s32.totalorder %s24, 1
      %p117 = por %p115, %p116
      %p119 = scmp.ne.s32.totalorder %s102, %s118
      %p120 = scmp.eq.s32.totalorder %s24, 0
      %p121 = por %p119, %p120
      %s123 = sadd.s32 %s122, 1
      %p126 = scmp.eq.s32.totalorder %s18, 1
      %p127 = scmp.ne.s32.totalorder %s122, %s124
      %p128 = scmp.eq.s32.totalorder %s18, 0
      %p129 = por %p127, %p128
      %p130 = scmp.ne.s32.totalorder %s122, %s124
      %p131 = scmp.eq.s32.totalorder %s23, 1
      %p132 = por %p130, %p131
      %p133 = scmp.ne.s32.totalorder %s124, %s125
      %p134 = scmp.eq.s32.totalorder %s23, 0
      %p135 = por %p133, %p134
      %p136 = scmp.ne.s32.totalorder %s124, %s125
      %p137 = scmp.eq.s32.totalorder %s24, 1
      %p138 = por %p136, %p137
      %p140 = scmp.ne.s32.totalorder %s125, %s139
      %p141 = scmp.eq.s32.totalorder %s24, 0
      %p142 = por %p140, %p141
      %s143 = ssub.s32 %s25, %s37
      %p144 = scmp.eq.s32.totalorder %s143, 0
      %s146 = sadd.s32 %s145, 1
      %s147 = scalar_select %p144, %s145, %s146
      %p150 = pneg %p144
      %p151 = scmp.eq.s32.totalorder %s18, 1
      %p152 = por %p150, %p151
      %p153 = scmp.ne.s32.totalorder %s145, %s148
      %p154 = scmp.eq.s32.totalorder %s18, 0
      %p155 = por %p153, %p154
      %p156 = scmp.ne.s32.totalorder %s145, %s148
      %p157 = scmp.eq.s32.totalorder %s23, 1
      %p158 = por %p156, %p157
      %p159 = scmp.ne.s32.totalorder %s148, %s149
      %p160 = scmp.eq.s32.totalorder %s23, 0
      %p161 = por %p159, %p160
      %p162 = scmp.ne.s32.totalorder %s148, %s149
      %p163 = scmp.eq.s32.totalorder %s24, 1
      %p164 = por %p162, %p163
      %p166 = scmp.ne.s32.totalorder %s149, %s165
      %p167 = scmp.eq.s32.totalorder %s24, 0
      %p168 = por %p166, %p167
      %s169 = ssub.s32 %s25, %s37
      %p170 = scmp.eq.s32.totalorder %s169, 0
      %s172 = sadd.s32 %s171, 1
      %s173 = scalar_select %p170, %s171, %s172
      %p176 = pneg %p170
      %p177 = scmp.eq.s32.totalorder %s18, 1
      %p178 = por %p176, %p177
      %p179 = scmp.ne.s32.totalorder %s171, %s174
      %p180 = scmp.eq.s32.totalorder %s18, 0
      %p181 = por %p179, %p180
      %p182 = scmp.ne.s32.totalorder %s171, %s174
      %p183 = scmp.eq.s32.totalorder %s23, 1
      %p184 = por %p182, %p183
      %p185 = scmp.ne.s32.totalorder %s174, %s175
      %p186 = scmp.eq.s32.totalorder %s23, 0
      %p187 = por %p185, %p186
      %p188 = scmp.ne.s32.totalorder %s174, %s175
      %p189 = scmp.eq.s32.totalorder %s24, 1
      %p190 = por %p188, %p189
      %p192 = scmp.ne.s32.totalorder %s175, %s191
      %p193 = scmp.eq.s32.totalorder %s24, 0
      %p194 = por %p192, %p193
      %p195 = scmp.le.s32.totalorder 1, %s18
      %p196 = scmp.lt.s32.totalorder %s18, 3
      %p197 = pnand %p195, %p196
      %p198 = pneg %p197
      // Predicated region
      $region9: #{tpu_custom_call.1} parent=5 // pred_check
        _
      $region10: #{tpu_custom_call.1} parent=5 // pred_check_branch
        %200 = sbr.rel (%p197) target = $region12
      $region11: #{tpu_custom_call.1} parent=5 // pred_region
        %s201 = ssub.s32 %s18, 1
        // Predicated region
        $region13: #{tpu_custom_call.1} parent=11 // pred_check
          %p202 = pneg %p135
        $region14: #{tpu_custom_call.1} parent=11 // pred_check_branch
          %204 = sbr.rel (%p202) target = $region16
        $region15: #{tpu_custom_call.1} parent=11 // pred_region
          _
        $region16: #{tpu_custom_call.1} parent=11 // pred_fallthru
          _
      $region12: #{tpu_custom_call.1} parent=5 // pred_fallthru
        _
      %p205 = scmp.lt.s32.totalorder %s18, 2
      // Predicated region
      $region17: #{tpu_custom_call.1} parent=5 // pred_check
        %p206 = pneg %p205
      $region18: #{tpu_custom_call.1} parent=5 // pred_check_branch
        %208 = sbr.rel (%p206) target = $region20
      $region19: #{tpu_custom_call.1} parent=5 // pred_region
        // Predicated region
        $region21: #{tpu_custom_call.1} parent=19 // pred_check
          %p209 = pneg %p52
        $region22: #{tpu_custom_call.1} parent=19 // pred_check_branch
          %211 = sbr.rel (%p209) target = $region24
        $region23: #{tpu_custom_call.1} parent=19 // pred_region
          %s212 = sand.u32 %s42, 1
          %s213 = scalar_lea.sflag [#allocation5], %s212
          %s214 = sand.u32 %s42, 1
          %s215 = smul.addr %s214, 2
          %s216 = scalar_lea.vmem [#allocation4], %s215
          %s218 = ssub.s32 32, 32
          %219 = vsyncadd %s213, %s218
          %s220 = sadd.s32 %s26, %s25
          %s221 = smul.addr %s220, 32
          %s222 = scalar_lea.hbm %s0, %s221
          %s224 = sshll.u32 %s216, 4
          %s225 = int_to_ptr.vmem [resolvable:$true] %s224
          %227 = dma.hbm_to_vmem [thread:$0]  %s222, 32, %s225, %s213
        $region24: #{tpu_custom_call.1} parent=19 // pred_fallthru
          _
        // Predicated region
        $region25: #{tpu_custom_call.1} parent=19 // pred_check
          %p228 = pneg %p80
        $region26: #{tpu_custom_call.1} parent=19 // pred_check_branch
          %230 = sbr.rel (%p228) target = $region28
        $region27: #{tpu_custom_call.1} parent=19 // pred_region
          %s231 = sand.u32 %s70, 1
          %s232 = scalar_lea.sflag [#allocation7], %s231
          %s233 = sand.u32 %s70, 1
          %s234 = smul.addr %s233, 2
          %s235 = scalar_lea.vmem [#allocation6], %s234
          %s237 = ssub.s32 32, 32
          %238 = vsyncadd %s232, %s237
          %s239 = sadd.s32 %s26, %s25
          %s240 = smul.addr %s239, 32
          %s241 = scalar_lea.hbm %s1, %s240
          %s243 = sshll.u32 %s235, 4
          %s244 = int_to_ptr.vmem [resolvable:$true] %s243
          %246 = dma.hbm_to_vmem [thread:$0]  %s241, 32, %s244, %s232
        $region28: #{tpu_custom_call.1} parent=19 // pred_fallthru
          _
        // Predicated region
        $region29: #{tpu_custom_call.1} parent=19 // pred_check
          %p247 = pneg %p108
        $region30: #{tpu_custom_call.1} parent=19 // pred_check_branch
          %249 = sbr.rel (%p247) target = $region32
        $region31: #{tpu_custom_call.1} parent=19 // pred_region
          %p250 = scmp.lt.s32.totalorder %s25, 1
          %s251 = scalar_select %p250, %s25, 1
          %p252 = scmp.lt.s32.totalorder %s26, 0
          %s253 = scalar_select %p252, %s26, 0
          %s254 = sadd.s32 %s253, %s251
          %s255 = smul.addr %s254, 2
          %s256 = scalar_lea.vmem %s2, %s255
        $region32: #{tpu_custom_call.1} parent=19 // pred_fallthru
          _
      $region20: #{tpu_custom_call.1} parent=5 // pred_fallthru
        _
      %p257 = scmp.le.s32.totalorder 1, %s18
      %p258 = scmp.lt.s32.totalorder %s18, 3
      %p259 = pnand %p257, %p258
      %p260 = pneg %p259
      // Predicated region
      $region33: #{tpu_custom_call.1} parent=5 // pred_check
        _
      $region34: #{tpu_custom_call.1} parent=5 // pred_check_branch
        %262 = sbr.rel (%p259) target = $region36
      $region35: #{tpu_custom_call.1} parent=5 // pred_region
        %s263 = ssub.s32 %s18, 1
        %s264 = sand.u32 %s45, 1
        %s265 = scalar_lea.sflag [#allocation5], %s264
        %s266 = sand.u32 %s45, 1
        %s267 = smul.addr %s266, 2
        %s268 = scalar_lea.vmem [#allocation4], %s267
        // Predicated region
        $region37: #{tpu_custom_call.1} parent=35 // pred_check
          %p269 = pneg %p58
        $region38: #{tpu_custom_call.1} parent=35 // pred_check_branch
          %271 = sbr.rel (%p269) target = $region40
        $region39: #{tpu_custom_call.1} parent=35 // pred_region
          %272 = dma.done %s265, 32
        $region40: #{tpu_custom_call.1} parent=35 // pred_fallthru
          _
        %s273 = sand.u32 %s73, 1
        %s274 = scalar_lea.sflag [#allocation7], %s273
        %s275 = sand.u32 %s73, 1
        %s276 = smul.addr %s275, 2
        %s277 = scalar_lea.vmem [#allocation6], %s276
        // Predicated region
        $region41: #{tpu_custom_call.1} parent=35 // pred_check
          %p278 = pneg %p86
        $region42: #{tpu_custom_call.1} parent=35 // pred_check_branch
          %280 = sbr.rel (%p278) target = $region44
        $region43: #{tpu_custom_call.1} parent=35 // pred_region
          %281 = dma.done %s274, 32
        $region44: #{tpu_custom_call.1} parent=35 // pred_fallthru
          _
        %s282 = sand.u32 %s45, 1
        %s283 = scalar_lea.sflag [#allocation5], %s282
        %s284 = sand.u32 %s45, 1
        %s285 = smul.addr %s284, 2
        %s286 = scalar_lea.vmem [#allocation4], %s285
        %p287 = pneg %p58
        %p288 = pneg %p55
        %s289 = sand.u32 %s73, 1
        %s290 = scalar_lea.sflag [#allocation7], %s289
        %s291 = sand.u32 %s73, 1
        %s292 = smul.addr %s291, 2
        %s293 = scalar_lea.vmem [#allocation6], %s292
        %p294 = pneg %p86
        %p295 = pneg %p83
        %p296 = scmp.lt.s32.totalorder %s27, 1
        %s297 = scalar_select %p296, %s27, 1
        %p298 = scmp.lt.s32.totalorder %s28, 0
        %s299 = scalar_select %p298, %s28, 0
        %s300 = sadd.s32 %s299, %s297
        %s301 = smul.addr %s300, 2
        %s302 = scalar_lea.vmem %s2, %s301
        %p303 = pneg %p114
        %p304 = pneg %p111
        %p305 = pneg %p135
        %p306 = pneg %p132
        %p307 = pneg %p161
        %p308 = pneg %p158
        %p309 = scmp.lt.s32.totalorder %s27, 1
        %s310 = scalar_select %p309, %s27, 1
        %s311 = scalar_lea.vmem %s4, %s310
        %p312 = pneg %p187
        %p313 = pneg %p184
        %p314 = scmp.lt.s32.totalorder %s27, 1
        %s315 = scalar_select %p314, %s27, 1
        %s316 = scalar_lea.vmem %s5, %s315
        %p317 = scmp.lt.s32.totalorder %s27, 1
        %s318 = scalar_select %p317, %s27, 1
        %p319 = scmp.lt.s32.totalorder %s28, 0
        %s320 = scalar_select %p319, %s28, 0
        %s321 = sadd.s32 %s320, %s318
        %s322 = smul.addr %s321, 2
        %s323 = scalar_lea.vmem %s2, %s322
        %p324 = scmp.lt.s32.totalorder %s27, 1
        %s325 = scalar_select %p324, %s27, 1
        %s326 = scalar_lea.vmem %s4, %s325
        %p327 = scmp.lt.s32.totalorder %s27, 1
        %s328 = scalar_select %p327, %s27, 1
        %s329 = scalar_lea.vmem %s5, %s328
        %p330 = scmp.eq.s32.totalorder %s28, 0
        // Predicated region
        $region45: #{tpu_custom_call.1} parent=35 // pred_check
          %p331 = pneg %p330
        $region46: #{tpu_custom_call.1} parent=35 // pred_check_branch
          %333 = sbr.rel (%p331) target = $region48
        $region47: #{tpu_custom_call.1} parent=35 // pred_region
          %334 = vst [vmem:[#allocation2] sm:$0x1] 0.0
          %335 = vst [vmem:[#allocation3] sm:$0x1] 0.0
        $region48: #{tpu_custom_call.1} parent=35 // pred_fallthru
          _
        %v336 = vld [vmem:[%s268] sm:$0x3]
        %v337 = vld [vmem:[%s277] sm:$0x3]
        %v338 = vmul.f32 %v336, 0.5
        %v339 = vtanh.pop %v338
        %v340 = vmul.f32 %v339, 0.5
        %v341 = vadd.f32 %v340, 0.5
        %vm342 = vcmp.ge.f32.partialorder %v336, 0.0
        %v343 = vsub.f32 1.0, %v341
        %v344 = vsel %vm342, %v341, %v343
        %v345 = vmax.f32 %v336, 0.0
        %v346 = vmul.f32 %v336, %v337
        %v347 = vsub.f32 %v345, %v346
        %v348 = vlog2.pop %v344
        %v349 = vmul.f32 %v348, 0.6931472
        %v350 = vsub.f32 %v347, %v349
        %v351 = vadd.f32 %v341, %v337
        %v352 = vmul.f32 %v341, %v337
        %v353 = vmul.f32 %v352, 2.0
        %v354 = vsub.f32 %v351, %v353
        %v355 = vmul.f32 %v354, %v354
        %v356 = vmul.f32 %v350, %v355
        %v357 = vld [vmem:[%s323] sm:$0x3]
        %v358 = vld [vmem:[%s3] sm:$0xf]
        %vm359 = vcmask 31744
        %v361 = vsel %vm359, %v357, 0
        %vm363 = vcmask 1043456
        %v365 = vsel %vm363, %v358, 0
        %367 = vmatprep.subr.mxu0 0.0
        %368 = vmatpush1.msra.mxu0 %v365
        %369 = vmatprep.subr.mxu0 0.0
        %370 = vmatpush1.msra.mxu0 0.0
        %371 = vmatprep.subr.mxu0 0.0
        %372 = vmatpush1.msra.mxu0 0.0
        %373 = vmatprep.subr.mxu0 0.0
        %374 = vmatpush1.msra.mxu0 0.0
        %375 = vmatprep.subr.mxu0 0.0
        %376 = vmatpush1.msra.mxu0 0.0
        %377 = vmatprep.subr.mxu0 0.0
        %378 = vmatpush1.msra.mxu0 0.0
        %379 = vmatprep.subr.mxu0 0.0
        %380 = vmatpush1.msra.mxu0 0.0
        %381 = vmatprep.subr.mxu0 0.0
        %382 = vmatpush1.msra.mxu0 0.0
        %383 = vmatprep.subr.mxu0 0.0
        %384 = vmatpush1.msra.mxu0 0.0
        %385 = vmatprep.subr.mxu0 0.0
        %386 = vmatpush1.msra.mxu0 0.0
        %387 = vmatprep.subr.mxu0 0.0
        %388 = vmatpush1.msra.mxu0 0.0
        %389 = vmatprep.subr.mxu0 0.0
        %390 = vmatpush1.msra.mxu0 0.0
        %391 = vmatprep.subr.mxu0 0.0
        %392 = vmatpush1.msra.mxu0 0.0
        %393 = vmatprep.subr.mxu0 0.0
        %394 = vmatpush1.msra.mxu0 0.0
        %395 = vmatprep.subr.mxu0 0.0
        %396 = vmatpush1.msra.mxu0 0.0
        %397 = vmatprep.subr.mxu0 0.0
        %398 = vmatpush1.msra.mxu0 0.0
        %399 = vmatprep.subr.mxu0 0.0
        %400 = vmatpush1.msra.mxu0 0.0
        %401 = vmatprep.subr.mxu0 0.0
        %402 = vmatpush1.msra.mxu0 0.0
        %403 = vmatprep.subr.mxu0 0.0
        %404 = vmatpush1.msra.mxu0 0.0
        %405 = vmatprep.subr.mxu0 0.0
        %406 = vmatpush1.msra.mxu0 0.0
        %407 = vmatprep.subr.mxu0 0.0
        %408 = vmatpush1.msra.mxu0 0.0
        %409 = vmatprep.subr.mxu0 0.0
        %410 = vmatpush1.msra.mxu0 0.0
        %411 = vmatprep.subr.mxu0 0.0
        %412 = vmatpush1.msra.mxu0 0.0
        %413 = vmatprep.subr.mxu0 0.0
        %414 = vmatpush1.msra.mxu0 0.0
        %415 = vmatprep.subr.mxu0 0.0
        %416 = vmatpush1.msra.mxu0 0.0
        %417 = vmatprep.subr.mxu0 0.0
        %418 = vmatpush1.msra.mxu0 0.0
        %419 = vmatprep.subr.mxu0 0.0
        %420 = vmatpush1.msra.mxu0 0.0
        %421 = vmatprep.subr.mxu0 0.0
        %422 = vmatpush1.msra.mxu0 0.0
        %423 = vmatprep.subr.mxu0 0.0
        %424 = vmatpush1.msra.mxu0 0.0
        %425 = vmatprep.subr.mxu0 0.0
        %426 = vmatpush1.msra.mxu0 0.0
        %427 = vmatprep.subr.mxu0 0.0
        %428 = vmatpush1.msra.mxu0 0.0
        %429 = vmatprep.subr.mxu0 0.0
        %430 = vmatpush1.msra.mxu0 0.0
        %431 = vmatprep.mubr.f32.mxu0 0.0
        %432 = vmatmul.mubr.f32.gmra.mrb[0].mxu0 %v361
        %v433 = vpop.f32.mrb[0].mxu0
        %v434 = vadd.f32 0.0, %v433
        %v435 = vpop.f32.mrb[0].mxu0
        %436 = vdwg.mxu0
        %v437 = vmul.f32 %v356, %v434
        %v438 = vmul.f32 %v337, -0.5
        %v439 = vadd.f32 %v438, 0.75
        %v440 = vmul.f32 %v439, %v437
        %vm441 = vcmp.eq.f32.partialorder %v337, 1.0
        %v442 = vsel %vm441, 1, 0
        %v443 = vcvt.s32.f32 %v442
        %v444 = vld [vmem:[#allocation2] sm:$0x1]
        %vm445 = vcmask 1041408
        %v446 = vsel %vm445, %v440, 0.0
        %v447 = vrot.slane %v446, 4
        %v448 = vadd.f32 %v446, %v447
        %v449 = vrot.slane %v448, 2
        %v450 = vadd.f32 %v448, %v449
        %v451 = vrot.slane %v450, 1
        %v452 = vadd.f32 %v450, %v451
        %v453 = vadd.f32 %v444, %v452
        %454 = vst [vmem:[#allocation2] sm:$0x1] %v453
        %v455 = vld [vmem:[#allocation3] sm:$0x1]
        %v456 = vsel %vm445, %v443, 0.0
        %v457 = vrot.slane %v456, 4
        %v458 = vadd.f32 %v456, %v457
        %v459 = vrot.slane %v458, 2
        %v460 = vadd.f32 %v458, %v459
        %v461 = vrot.slane %v460, 1
        %v462 = vadd.f32 %v460, %v461
        %v463 = vadd.f32 %v455, %v462
        %464 = vst [vmem:[#allocation3] sm:$0x1] %v463
        // Predicated region
        $region49: #{tpu_custom_call.1} parent=35 // pred_check
          %p465 = pneg %p330
        $region50: #{tpu_custom_call.1} parent=35 // pred_check_branch
          %467 = sbr.rel (%p465) target = $region52
        $region51: #{tpu_custom_call.1} parent=35 // pred_region
          %v468 = vld [vmem:[#allocation2] sm:$0x1]
          %vm469 = vcmask 1040384
          %v470 = vsel %vm469, %v468, 0.0
          %471 = vadd.xlane.f32.xlu0 %v470
          %v472 = vpop.xlane.xlu0 %471
          %v473 = vrot.slane %v472, 4
          %v474 = vadd.f32 %v472, %v473
          %v475 = vrot.slane %v474, 2
          %v476 = vadd.f32 %v474, %v475
          %v477 = vrot.slane %v476, 1
          %v478 = vadd.f32 %v476, %v477
          %s479 = vtos %v478
          %v480 = vstv %s479
          %vm481 = vcmask 0
          %482 = vst.msk [vmem:[%s326] sm:$0x1] %vm481, %v480
          %v483 = vld [vmem:[#allocation3] sm:$0x1]
          %v484 = vsel %vm469, %v483, 0.0
          %485 = vadd.xlane.f32.xlu0 %v484
          %v486 = vpop.xlane.xlu0 %485
          %v487 = vrot.slane %v486, 4
          %v488 = vadd.f32 %v486, %v487
          %v489 = vrot.slane %v488, 2
          %v490 = vadd.f32 %v488, %v489
          %v491 = vrot.slane %v490, 1
          %v492 = vadd.f32 %v490, %v491
          %s493 = vtos %v492
          %v494 = vstv %s493
          %495 = vst.msk [vmem:[%s329] sm:$0x1] %vm481, %v494
        $region52: #{tpu_custom_call.1} parent=35 // pred_fallthru
          _
        %p496 = scmp.lt.s32.totalorder %s27, 1
        %s497 = scalar_select %p496, %s27, 1
        %s498 = scalar_lea.vmem %s4, %s497
        %p499 = scmp.lt.s32.totalorder %s27, 1
        %s500 = scalar_select %p499, %s27, 1
        %s501 = scalar_lea.vmem %s5, %s500
        // Predicated region
        $region53: #{tpu_custom_call.1} parent=35 // pred_check
          %p502 = pneg %p158
        $region54: #{tpu_custom_call.1} parent=35 // pred_check_branch
          %504 = sbr.rel (%p502) target = $region56
        $region55: #{tpu_custom_call.1} parent=35 // pred_region
          _
        $region56: #{tpu_custom_call.1} parent=35 // pred_fallthru
          _
        // Predicated region
        $region57: #{tpu_custom_call.1} parent=35 // pred_check
          %p505 = pneg %p184
        $region58: #{tpu_custom_call.1} parent=35 // pred_check_branch
          %507 = sbr.rel (%p505) target = $region60
        $region59: #{tpu_custom_call.1} parent=35 // pred_region
          _
        $region60: #{tpu_custom_call.1} parent=35 // pred_fallthru
          _
      $region36: #{tpu_custom_call.1} parent=5 // pred_fallthru
        _
      %p508 = scmp.le.s32.totalorder 2, %s18
      // Predicated region
      $region61: #{tpu_custom_call.1} parent=5 // pred_check
        %p509 = pneg %p508
      $region62: #{tpu_custom_call.1} parent=5 // pred_check_branch
        %511 = sbr.rel (%p509) target = $region64
      $region63: #{tpu_custom_call.1} parent=5 // pred_region
        %s512 = ssub.s32 %s18, 2
        // Predicated region
        $region65: #{tpu_custom_call.1} parent=63 // pred_check
          %p513 = pneg %p164
        $region66: #{tpu_custom_call.1} parent=63 // pred_check_branch
          %515 = sbr.rel (%p513) target = $region68
        $region67: #{tpu_custom_call.1} parent=63 // pred_region
          %p516 = scmp.lt.s32.totalorder %s29, 1
          %s517 = scalar_select %p516, %s29, 1
          %s518 = scalar_lea.vmem %s4, %s517
        $region68: #{tpu_custom_call.1} parent=63 // pred_fallthru
          _
        // Predicated region
        $region69: #{tpu_custom_call.1} parent=63 // pred_check
          %p519 = pneg %p190
        $region70: #{tpu_custom_call.1} parent=63 // pred_check_branch
          %521 = sbr.rel (%p519) target = $region72
        $region71: #{tpu_custom_call.1} parent=63 // pred_region
          %p522 = scmp.lt.s32.totalorder %s29, 1
          %s523 = scalar_select %p522, %s29, 1
          %s524 = scalar_lea.vmem %s5, %s523
        $region72: #{tpu_custom_call.1} parent=63 // pred_fallthru
          _
      $region64: #{tpu_custom_call.1} parent=5 // pred_fallthru
        _
    $region6: #{tpu_custom_call.1} parent=1 // loop_footer
      %s22 = sadd.s32 1, %s18
    $region7: #{tpu_custom_call.1} parent=1 // loop_footer_branch
      %17 = sbr.rel target = $region3
    $region8: #{tpu_custom_call.1} parent=1 // loop_exit
      _
    %525 = vsyncpa [#allocation5], 1
    %s526 = scalar_lea.sflag [#allocation5], 1
    %527 = vsyncpa %s526, 1
    %528 = vsyncpa [#allocation7], 1
    %s529 = scalar_lea.sflag [#allocation7], 1
    %530 = vsyncpa %s529, 1

</llo_original>
